<compile_context>
chip_gen: v7x
topology: tpu7x:2x2x1
jax: 0.10.0
libtpu: 0.0.40
codegen_flags: <defaults>
</compile_context>

<pallas_src>
import functools

import jax
import jax.numpy as jnp
from jax import lax
from jax.experimental import pallas as pl
from jax.experimental.pallas import tpu as pltpu


def _locked_dropout_kernel(seed_ref, x_ref, o_ref, *, keep_prob, tt, B, H):
    """One grid step covers `tt` timesteps; block layout is (tt, B*H)."""
    # ---- stateless counter-based RNG: hash(seed, global timestep, feature) ----
    t0 = pl.program_id(0) * tt
    rows = (lax.broadcasted_iota(jnp.int32, (tt, H), 0) + t0).astype(jnp.uint32)
    cols = lax.broadcasted_iota(jnp.int32, (tt, H), 1).astype(jnp.uint32)
    seed = seed_ref[0].astype(jnp.uint32)

    h = seed ^ (rows * jnp.uint32(0x9E3779B1)) ^ (cols * jnp.uint32(0x85EBCA77))
    h = h ^ (h >> 16)
    h = h * jnp.uint32(0x85EBCA6B)
    h = h ^ (h >> 13)
    h = h * jnp.uint32(0xC2B2AE35)
    h = h ^ (h >> 16)

    # Bernoulli(keep_prob) via unsigned threshold compare; inverted-dropout scale.
    # Select/scale stay in f32; cast to the activation dtype only at the store.
    thresh = jnp.uint32(min(int(round(keep_prob * 2.0 ** 32)), 2 ** 32 - 1))
    scale = jnp.float32(1.0 / keep_prob)
    mask = jnp.where(h < thresh, scale, jnp.float32(0.0))            # (tt, H) f32

    # "Locked" across the batch dim: apply the same (tt, H) mask to each batch slab.
    # Static slices (128-aligned when H % 128 == 0); no (tt, B*H) mask temporary.
    for b in range(B):
        xb = x_ref[:, b * H:(b + 1) * H]
        o_ref[:, b * H:(b + 1) * H] = (xb.astype(jnp.float32) * mask).astype(o_ref.dtype)


def _round_up(v, m):
    return ((v + m - 1) // m) * m


def locked_dropout(x, seed, dropout, training=True, donate_input=False):
    """x: (T, B, H). Training: Bernoulli(1-p) mask per (t, h), shared over dim 1,
    scaled by 1/(1-p). Eval: identity. Matches the PyTorch LockedDropout module.

    `seed` must be varied per call/layer to obtain independent masks.
    `donate_input=True` aliases the output onto x's buffer (capacity win only)."""
    if (not training) or float(dropout) == 0.0:
        return x
    if float(dropout) >= 1.0:
        # keep_prob == 0 makes the 1/(1-p) scale degenerate; everything is dropped.
        return jnp.zeros_like(x)

    T, B, H = x.shape
    keep_prob = 1.0 - float(dropout)

    # Lane-dense 2-D view: free row-major reshape; last dim B*H (multiple of 128 when
    # H is), second-to-last dim carries timesteps on sublanes.
    x2 = x.reshape(T, B * H)

    # ---- tile-size heuristic -------------------------------------------------
    # Sublane packing per vreg: 8 rows for 4-byte, 16 for 2-byte, 32 for 1-byte dtypes.
    sub = 8 * max(1, 4 // max(1, x.dtype.itemsize))
    row_bytes = B * H * x.dtype.itemsize
    block_target = 1 << 20          # ~1 MiB blocks: past the measured BW plateau and
                                    # comfortably inside v5e's 16 MiB scoped default.
    if T <= sub:
        tt = T                      # full-dim block (satisfies the (8,128) rule).
    else:
        # Rows fitting the target, sublane-aligned, never below one sublane group.
        tt = max(sub, (block_target // max(row_bytes, 1) // sub) * sub)
        # Keep >= ~4 grid steps when T permits: lets the BlockSpec pipeline overlap
        # prefetch/compute/writeback and gives v7x's 2nd TensorCore work to shard.
        tt = min(tt, _round_up(pl.cdiv(T, 4), sub))

    block_bytes = tt * row_bytes
    # Explicit scoped-VMEM budget: double-buffered input + output blocks plus the
    # small f32 hash/mask temporaries; stated explicitly rather than assuming the
    # per-generation default (16 MiB v5e / 32 MiB v6e,v7x).
    vmem_limit = min(max(4 * block_bytes + (2 << 20), 8 << 20), 96 << 20)

    kernel = functools.partial(_locked_dropout_kernel,
                               keep_prob=keep_prob, tt=tt, B=B, H=H)
    seed_arr = jnp.asarray([seed], dtype=jnp.int32)

    out2 = pl.pallas_call(
        kernel,
        out_shape=jax.ShapeDtypeStruct((T, B * H), x.dtype),
        grid_spec=pltpu.PrefetchScalarGridSpec(
            num_scalar_prefetch=1,
            grid=(pl.cdiv(T, tt),),
            in_specs=[pl.BlockSpec((tt, B * H), lambda i, _s: (i, 0))],
            out_specs=pl.BlockSpec((tt, B * H), lambda i, _s: (i, 0)),
        ),
        compiler_params=pltpu.CompilerParams(
            # Blocks are independent (stateless hash RNG) -> shard across both
            # TensorCores on v7x; harmless on single-TC v5e/v6e.
            dimension_semantics=("parallel",),
            vmem_limit_bytes=int(vmem_limit)),
        # Capacity-only win: write the result in place when x is dead afterwards.
        input_output_aliases=({1: 0} if donate_input else {}),
    )(seed_arr, x2)
    return out2.reshape(T, B, H)


if __name__ == "__main__":
    # (T=seq, B=batch, H=hidden) — time-major, matching the (size(0), 1, size(2)) mask.
    T, B, H = 8, 2, 128
    dropout = 0.25
    keep_prob = 1.0 - dropout

    key = jax.random.PRNGKey(0)
    x = jax.random.normal(key, (T, B, H), dtype=jnp.float32)

    out = jax.block_until_ready(
        locked_dropout(x, seed=1234, dropout=dropout, training=True))

    # 1) every element is either 0 or x / keep_prob (inverted-dropout scaling)
    scaled = x / keep_prob
    is_zero = jnp.isclose(out, 0.0, atol=1e-6)
    is_kept = jnp.isclose(out, scaled, rtol=1e-5, atol=1e-6)
    assert bool(jnp.all(is_zero | is_kept)), "output is not mask * x / keep_prob"

    # 2) mask is shared ("locked") across the batch dimension (dim 1)
    kept = out != 0.0
    assert bool(jnp.all(kept[:, 0, :] == kept[:, 1, :])), "mask not shared across batch"

    # 3) roughly keep_prob of the elements are kept (RNG sanity)
    frac_kept = float(jnp.mean(kept[:, 0, :].astype(jnp.float32)))
    assert 0.55 < frac_kept < 0.95, f"unexpected keep fraction {frac_kept}"

    # 4) eval mode is identity
    out_eval = locked_dropout(x, seed=1234, dropout=dropout, training=False)
    assert bool(jnp.all(out_eval == x))

    # 5) bf16 path: f32 mask/scale applied, cast only at the store; longer T exercises
    #    the multi-step grid (tt capped at ~cdiv(T, 4) rounded to 16 sublanes).
    Tb = 64
    xb = jax.random.normal(jax.random.PRNGKey(1), (Tb, B, H), dtype=jnp.bfloat16)
    outb = jax.block_until_ready(
        locked_dropout(xb, seed=77, dropout=dropout, training=True))
    scaled_b = (xb.astype(jnp.float32) / keep_prob).astype(jnp.bfloat16)
    keptb = outb != 0
    assert bool(jnp.all((outb == 0) | (outb == scaled_b))), "bf16 output mismatch"
    assert bool(jnp.all(keptb[:, 0, :] == keptb[:, 1, :])), "bf16 mask not locked"

    print("KERNEL_OK")
</pallas_src>

<mosaic_0001>
module attributes {stable_mosaic.version = 11 : i64} {
  func.func @_locked_dropout_kernel(%arg0: i32, %arg1: memref<1xi32, #tpu.memory_space<smem>>, %arg2: memref<8x256xf32, #tpu.memory_space<vmem>>, %arg3: memref<8x256xf32, #tpu.memory_space<vmem>>) attributes {dimension_semantics = [#tpu.dimension_semantics<parallel>], iteration_bounds = array<i64: 1>, scalar_prefetch = 1 : i64, scratch_operands = 0 : i64, tpu.core_type = #tpu.core_type<tc>, window_params = [{transform_indices = @transform_0, window_bounds = array<i64: 8, 256>}, {transform_indices = @transform_1, window_bounds = array<i64: 8, 256>}]} {
    %c8_i32 = arith.constant 8 : i32
    %0 = arith.muli %arg0, %c8_i32 : i32
    %1 = tpu.iota {dimensions = array<i32: 0>} : vector<8x128xi32>
    %2 = vector.broadcast %0 : i32 to vector<8x128xi32>
    %3 = arith.addi %1, %2 : vector<8x128xi32>
    %4 = tpu.iota {dimensions = array<i32: 1>} : vector<8x128xi32>
    %c0 = arith.constant 0 : index
    %5 = memref.load %arg1[%c0] : memref<1xi32, #tpu.memory_space<smem>>
    %c-1640531535_i32 = arith.constant -1640531535 : i32
    %6 = vector.broadcast %c-1640531535_i32 : i32 to vector<8x128xi32>
    %7 = arith.muli %3, %6 : vector<8x128xi32>
    %8 = vector.broadcast %5 : i32 to vector<8x128xi32>
    %9 = arith.xori %8, %7 : vector<8x128xi32>
    %c-2048144777_i32 = arith.constant -2048144777 : i32
    %10 = vector.broadcast %c-2048144777_i32 : i32 to vector<8x128xi32>
    %11 = arith.muli %4, %10 : vector<8x128xi32>
    %12 = arith.xori %9, %11 : vector<8x128xi32>
    %c16_i32 = arith.constant 16 : i32
    %13 = vector.broadcast %c16_i32 : i32 to vector<8x128xi32>
    %14 = arith.shrui %12, %13 : vector<8x128xi32>
    %15 = arith.xori %12, %14 : vector<8x128xi32>
    %c-2048144789_i32 = arith.constant -2048144789 : i32
    %16 = vector.broadcast %c-2048144789_i32 : i32 to vector<8x128xi32>
    %17 = arith.muli %15, %16 : vector<8x128xi32>
    %c13_i32 = arith.constant 13 : i32
    %18 = vector.broadcast %c13_i32 : i32 to vector<8x128xi32>
    %19 = arith.shrui %17, %18 : vector<8x128xi32>
    %20 = arith.xori %17, %19 : vector<8x128xi32>
    %c-1028477387_i32 = arith.constant -1028477387 : i32
    %21 = vector.broadcast %c-1028477387_i32 : i32 to vector<8x128xi32>
    %22 = arith.muli %20, %21 : vector<8x128xi32>
    %c16_i32_0 = arith.constant 16 : i32
    %23 = vector.broadcast %c16_i32_0 : i32 to vector<8x128xi32>
    %24 = arith.shrui %22, %23 : vector<8x128xi32>
    %25 = arith.xori %22, %24 : vector<8x128xi32>
    %c-1073741824_i32 = arith.constant -1073741824 : i32
    %26 = vector.broadcast %c-1073741824_i32 : i32 to vector<8x128xi32>
    %27 = arith.cmpi ult, %25, %26 : vector<8x128xi32>
    %cst = arith.constant 1.33333337 : f32
    %cst_1 = arith.constant 0.000000e+00 : f32
    %28 = vector.broadcast %cst : f32 to vector<8x128xf32>
    %29 = vector.broadcast %cst_1 : f32 to vector<8x128xf32>
    %30 = arith.select %27, %28, %29 : vector<8x128xi1>, vector<8x128xf32>
    %c0_2 = arith.constant 0 : index
    %c0_3 = arith.constant 0 : index
    %31 = vector.load %arg2[%c0_2, %c0_3] : memref<8x256xf32, #tpu.memory_space<vmem>>, vector<8x128xf32>
    %32 = arith.mulf %31, %30 : vector<8x128xf32>
    %c0_4 = arith.constant 0 : index
    %c0_5 = arith.constant 0 : index
    %33 = vector.load %arg3[%c0_4, %c0_5] : memref<8x256xf32, #tpu.memory_space<vmem>>, vector<8x128xf32>
    tpu.vector_store %arg3[%c0_4, %c0_5], %32 {strides = array<i32>} : memref<8x256xf32, #tpu.memory_space<vmem>>, vector<8x128xf32>,
    %c0_6 = arith.constant 0 : index
    %c128 = arith.constant 128 : index
    %34 = vector.load %arg2[%c0_6, %c128] : memref<8x256xf32, #tpu.memory_space<vmem>>, vector<8x128xf32>
    %35 = arith.mulf %34, %30 : vector<8x128xf32>
    %c0_7 = arith.constant 0 : index
    %c128_8 = arith.constant 128 : index
    %36 = vector.load %arg3[%c0_7, %c128_8] : memref<8x256xf32, #tpu.memory_space<vmem>>, vector<8x128xf32>
    tpu.vector_store %arg3[%c0_7, %c128_8], %35 {strides = array<i32>} : memref<8x256xf32, #tpu.memory_space<vmem>>, vector<8x128xf32>,
    return
  }
  func.func @transform_0(%arg0: i32, %arg1: memref<1xi32, #tpu.memory_space<smem>>) -> (i32, i32) {
    %c0_i32 = arith.constant 0 : i32
    %c0_i32_0 = arith.constant 0 : i32
    return %arg0, %c0_i32 : i32, i32
  }
  func.func @transform_1(%arg0: i32, %arg1: memref<1xi32, #tpu.memory_space<smem>>) -> (i32, i32) {
    %c0_i32 = arith.constant 0 : i32
    %c0_i32_0 = arith.constant 0 : i32
    return %arg0, %c0_i32 : i32, i32
  }
}

</mosaic_0001>

<llo_original>
// kernel: tpu_custom_call.1
$region0: #{tpu_custom_call.1}
  #allocation0 [shape = 'u32[]', space=smem, size = 0x4, offset = 0x4, fixed_abs, tag = 'smem constant byte address 0x4 - core index']
  #allocation1 [shape = 'u32[144,128]{1,0:T(1,128)}', space=vmem, size = 0x12000, scoped, tag = 'internal scratch']
  #allocation2 [shape = 's32[1]{0}', space=sflag, size = 0x4, scoped, tag = 'scoped memory for tpu_custom_call.1']
  #allocation3 [shape = 's32[1]{0:T(128)S(6)}', space=smem, size = 0x200, scoped, tag = 'prefetched SMEM operand 0']
  %s0 = inlined_call_operand.<no memory space> [shape: s32[1], index: 0, kind: input, shape index: {}]
  %s1 = inlined_call_operand.hbm [shape: f32[8,256], index: 1, kind: input, shape index: {}]
  %s2 = inlined_call_operand.hbm [shape: f32[8,256], index: 2, kind: output, shape index: {}]
  %s3 = sld [smem:[#allocation0]]
  $region18: #{tpu_custom_call.1} parent=0
    _
  %s5 = ssub.s32 1, %s3
  %s6 = scalar_select 0, %s5, %s3
  %7 = sst [smem:[#allocation3]] %s0
  $region1: #{tpu_custom_call.1} parent=0
    #allocation4 [shape = 'u8[8192]{0}', space=vmem, size = 0x2000, scoped, tag = 'input window, operand 1, single buffered']
    #allocation5 [shape = 's32[1]{0}', space=sflag, size = 0x4, scoped, tag = 'scoped memory for tpu_custom_call.1']
    #allocation6 [shape = 's32[1]{0}', space=sflag, size = 0x4, scoped, tag = 'scoped memory for tpu_custom_call.1']
    #allocation7 [shape = 'u8[8192]{0}', space=vmem, size = 0x2000, scoped, tag = 'output window, operand 0, single buffered']
    %8 = vsyncpa [#allocation5], 0
    %9 = vsyncpa [#allocation6], 0
    // Predicated region
    $region2: #{tpu_custom_call.1} parent=1 // pred_check
      _
    $region3: #{tpu_custom_call.1} parent=1 // pred_check_branch
      %11 = sbr.rel (0) target = $region5
    $region4: #{tpu_custom_call.1} parent=1 // pred_region
      %s13 = ssub.s32 256, 256
      %14 = vsyncadd [#allocation5], %s13
      %s16 = sshll.u32 [#allocation4], 4
      %s17 = int_to_ptr.vmem [resolvable:$true] %s16
      %19 = dma.hbm_to_vmem [thread:$0]  %s1, 256, %s17, [#allocation5]
    $region5: #{tpu_custom_call.1} parent=1 // pred_fallthru
      _
    // Predicated region
    $region6: #{tpu_custom_call.1} parent=1 // pred_check
      _
    $region7: #{tpu_custom_call.1} parent=1 // pred_check_branch
      %21 = sbr.rel (0) target = $region9
    $region8: #{tpu_custom_call.1} parent=1 // pred_region
      %22 = dma.done [#allocation5], 256
    $region9: #{tpu_custom_call.1} parent=1 // pred_fallthru
      _
    %s23 = smul.u32 0, 8
    %v24 = vlaneseq
    %v25 = vshrl.u32 %v24, 7
    %v26 = vstv %s23
    %v27 = vadd.s32 %v25, %v26
    %v28 = vlaneseq
    %v29 = vand.u32 %v28, 127
    %s30 = sld [smem:[#allocation3]]
    %v31 = vmul.u32 %v27, 2654435761
    %v32 = vstv %s30
    %v33 = vxor.u32 %v32, %v31
    %v34 = vmul.u32 %v29, 2246822519
    %v35 = vxor.u32 %v33, %v34
    %v36 = vshrl.u32 %v35, 16
    %v37 = vxor.u32 %v35, %v36
    %v38 = vmul.u32 %v37, 2246822507
    %v39 = vshrl.u32 %v38, 13
    %v40 = vxor.u32 %v38, %v39
    %v41 = vmul.u32 %v40, 3266489909
    %v42 = vshrl.u32 %v41, 16
    %v43 = vxor.u32 %v41, %v42
    %vm44 = vcmp.lt.u32.totalorder %v43, 3221225472
    %v45 = vsel %vm44, 1.3333334, 0.0
    %v46 = vld [vmem:[#allocation4] sm:$0xff]
    %v47 = vmul.f32 %v46, %v45
    %48 = vst [vmem:[#allocation7] sm:$0xff] %v47
    %v49 = vld [vmem:[#allocation4 + $0x8] sm:$0xff]
    %v50 = vmul.f32 %v49, %v45
    %51 = vst [vmem:[#allocation7 + $0x8] sm:$0xff] %v50
    // Predicated region
    $region10: #{tpu_custom_call.1} parent=1 // pred_check
      _
    $region11: #{tpu_custom_call.1} parent=1 // pred_check_branch
      %53 = sbr.rel (0) target = $region13
    $region12: #{tpu_custom_call.1} parent=1 // pred_region
      %s55 = ssub.s32 256, 256
      %56 = vsyncadd [#allocation6], %s55
      %s58 = sshll.u32 [#allocation7], 4
      %s59 = int_to_ptr.vmem [resolvable:$true] %s58
      %61 = dma.vmem_to_hbm [thread:$0]  %s59, 256, %s2, [#allocation6]
    $region13: #{tpu_custom_call.1} parent=1 // pred_fallthru
      _
    // Predicated region
    $region14: #{tpu_custom_call.1} parent=1 // pred_check
      _
    $region15: #{tpu_custom_call.1} parent=1 // pred_check_branch
      %63 = sbr.rel (0) target = $region17
    $region16: #{tpu_custom_call.1} parent=1 // pred_region
      %64 = dma.done [#allocation6], 256
    $region17: #{tpu_custom_call.1} parent=1 // pred_fallthru
      _
    %65 = vsyncpa [#allocation5], 1
    %66 = vsyncpa [#allocation6], 1

</llo_original>
